<compile_context>
chip_gen: v6e
topology: v6e:2x2x1
jax: 0.10.0
libtpu: 0.0.40
codegen_flags: <defaults>
</compile_context>

<pallas_src>
import functools
import math

import jax
import jax.numpy as jnp
from jax.experimental import pallas as pl
from jax.experimental.pallas import tpu as pltpu


def _round_up(x, m):
    return ((x + m - 1) // m) * m


# ---------------------------------------------------------------------------
# Fused MLP kernel. One batch tile (TM rows) per grid step; all layers fused.
#   refs = (w_0 .. w_{n-1}, b_0 .. b_{n-1}, out_ref)
# ---------------------------------------------------------------------------
def mlp_kernel(n_layers, x_ref, *refs):
    w_refs = refs[:n_layers]
    b_refs = refs[n_layers:2 * n_layers]
    out_ref = refs[2 * n_layers]

    h = x_ref[...].astype(jnp.float32)                          # (TM, d_in) f32
    for i in range(n_layers):                                   # static unroll
        # bf16 x bf16 on the MXU, f32 accumulate.
        h = jnp.dot(h.astype(jnp.bfloat16), w_refs[i][...],
                    preferred_element_type=jnp.float32)
        h = h + b_refs[i][...]                                  # f32 bias add
        if i < n_layers - 1:                                    # ReLU after every
            h = jnp.maximum(h, 0.0)                             # layer but the last
    out_ref[...] = h.astype(out_ref.dtype)                      # lane-dense store


# ---------------------------------------------------------------------------
# Wrapper
# ---------------------------------------------------------------------------
def encoder_forward(params, x):
    dims = params["dims"]
    pads = params["pads"]
    n_layers = len(dims) - 1
    B, d0 = x.shape
    assert d0 == dims[0], f"expected input dim {dims[0]}, got {d0}"

    w_list = params["w"]
    b_list = params["b"]
    out_pad = pads[-1]

    # Batch (M) tile: multiple of 8 sublanes, <=256 (fills v6e/v7x MXU LHS).
    # Partial last tile is handled by Pallas (masked writeback), so no batch pad.
    TM = min(256, _round_up(B, 8))
    grid = (pl.cdiv(B, TM),)

    # Resident weights/biases: constant index_map -> one DMA, reused per tile.
    w_specs = [pl.BlockSpec(w.shape, lambda i: (0, 0)) for w in w_list]
    b_specs = [pl.BlockSpec(b.shape, lambda i: (0, 0)) for b in b_list]

    # Explicit VMEM budget (v7x has only 64 MiB physical VMEM).
    max_pad = max(pads)
    vmem_bytes = (
        sum(w.size * 2 for w in w_list)            # bf16 weights (resident)
        + sum(b.size * 4 for b in b_list)          # f32 biases (resident)
        + 2 * TM * _round_up(d0, 128) * 4          # double-buffered x tiles
        + 2 * TM * out_pad * 4                     # double-buffered out tiles
        + 2 * TM * max_pad * 4                     # live f32 intermediates
    )
    vmem_limit = int(min(max(2 * vmem_bytes, 4 << 20), 48 << 20))

    out = pl.pallas_call(
        functools.partial(mlp_kernel, n_layers),
        out_shape=jax.ShapeDtypeStruct((B, out_pad), jnp.float32),
        grid=grid,
        in_specs=[pl.BlockSpec((TM, d0), lambda i: (i, 0))] + w_specs + b_specs,
        out_specs=pl.BlockSpec((TM, out_pad), lambda i: (i, 0)),
        compiler_params=pltpu.CompilerParams(
            dimension_semantics=("parallel",),
            vmem_limit_bytes=vmem_limit),
    )(x, *w_list, *b_list)

    # Logical output width: 2 * latent_dim (fuses under the caller's jit).
    return out[:, : dims[-1]]


# ---------------------------------------------------------------------------
# Parameter init (PyTorch nn.Linear default: U(-1/sqrt(fan_in), 1/sqrt(fan_in)))
# ---------------------------------------------------------------------------
def init_encoder_params(key, layer_dims, latent_dim, cond_dim):
    layer_dims = list(layer_dims)
    layer_dims[0] += cond_dim                      # as in Encoder.__init__
    dims = layer_dims + [2 * latent_dim]           # MLP layers + linear_mean_log
    n_layers = len(dims) - 1

    keys = jax.random.split(key, n_layers)
    layers = []
    for k, (fan_in, fan_out) in zip(keys, zip(dims[:-1], dims[1:])):
        kw, kb = jax.random.split(k)
        bound = 1.0 / math.sqrt(fan_in)
        w = jax.random.uniform(kw, (fan_in, fan_out), jnp.float32, -bound, bound)
        b = jax.random.uniform(kb, (fan_out,), jnp.float32, -bound, bound)
        layers.append((w, b))

    # Per-layer padding: every output width rounded up to 128 lanes (lane-dense
    # matmuls/stores); layer-i in-dim matches the previous layer's padded width,
    # layer-0 in-dim stays at the logical d0 so x needs no wrapper padding.
    # Zero padding keeps the extra lanes exactly zero through every layer.
    pads = [_round_up(d, 128) for d in dims[1:]]
    in_dims = [dims[0]] + pads[:-1]
    w_padded, b_padded = [], []
    for i, (w, b) in enumerate(layers):
        wp = jnp.zeros((in_dims[i], pads[i]), jnp.float32)
        wp = wp.at[: w.shape[0], : w.shape[1]].set(w)
        bp = jnp.zeros((1, pads[i]), jnp.float32)
        bp = bp.at[0, : b.shape[0]].set(b)
        w_padded.append(wp.astype(jnp.bfloat16))   # MXU-native, half the DMA bytes
        b_padded.append(bp)                        # biases stay f32 (tiny)

    return {
        "dims": dims,
        "pads": pads,
        "layers": layers,      # unpadded f32, for the references
        "w": w_padded,
        "b": b_padded,
    }


# Reference matching the kernel's numerics (bf16 operands, f32 accumulate).
def encoder_reference_bf16(params, x):
    h = x.astype(jnp.float32)
    layers = params["layers"]
    for i, (w, b) in enumerate(layers):
        wq = w.astype(jnp.bfloat16).astype(jnp.float32)
        hq = h.astype(jnp.bfloat16).astype(jnp.float32)
        h = jnp.dot(hq, wq, preferred_element_type=jnp.float32) + b
        if i < len(layers) - 1:
            h = jnp.maximum(h, 0.0)
    return h


# Pure-f32 reference of Encoder.forward (semantic sanity check).
def encoder_reference_f32(params, x):
    h = x
    layers = params["layers"]
    for i, (w, b) in enumerate(layers):
        h = h @ w + b
        if i < len(layers) - 1:
            h = jnp.maximum(h, 0.0)
    return h


if __name__ == "__main__":
    key = jax.random.PRNGKey(0)
    B = 2
    layer_dims = [32, 64, 32]      # Encoder(layer_dims, latent_dim, cond_dim)
    latent_dim = 16
    cond_dim = 16

    kp, kx = jax.random.split(key)
    params = init_encoder_params(kp, layer_dims, latent_dim, cond_dim)

    # Caller feeds x with last dim = layer_dims[0] + cond_dim (already concatenated).
    in_dim = layer_dims[0] + cond_dim
    x = jax.random.normal(kx, (B, in_dim), jnp.float32)

    fwd = jax.jit(lambda xx: encoder_forward(params, xx))
    encoded = fwd(x)
    jax.block_until_ready(encoded)

    assert encoded.shape == (B, 2 * latent_dim), encoded.shape
    assert bool(jnp.all(jnp.isfinite(encoded)))

    ref_bf16 = encoder_reference_bf16(params, x)
    assert bool(jnp.allclose(encoded, ref_bf16, rtol=2e-3, atol=2e-3)), (
        float(jnp.max(jnp.abs(encoded - ref_bf16))))

    ref_f32 = encoder_reference_f32(params, x)
    assert bool(jnp.allclose(encoded, ref_f32, rtol=3e-2, atol=3e-2)), (
        float(jnp.max(jnp.abs(encoded - ref_f32))))

    print("KERNEL_OK")
</pallas_src>

<mosaic_0001>
module attributes {stable_mosaic.version = 11 : i64} {
  func.func @mlp_kernel(%arg0: i32, %arg1: memref<8x48xf32, #tpu.memory_space<vmem>>, %arg2: memref<48x128xbf16, #tpu.memory_space<vmem>>, %arg3: memref<128x128xbf16, #tpu.memory_space<vmem>>, %arg4: memref<128x128xbf16, #tpu.memory_space<vmem>>, %arg5: memref<1x128xf32, #tpu.memory_space<vmem>>, %arg6: memref<1x128xf32, #tpu.memory_space<vmem>>, %arg7: memref<1x128xf32, #tpu.memory_space<vmem>>, %arg8: memref<8x128xf32, #tpu.memory_space<vmem>>) attributes {dimension_semantics = [#tpu.dimension_semantics<parallel>], iteration_bounds = array<i64: 1>, scalar_prefetch = 0 : i64, scratch_operands = 0 : i64, tpu.core_type = #tpu.core_type<tc>, window_params = [{transform_indices = @transform_0, window_bounds = array<i64: 8, 48>}, {pipeline_mode = #tpu.pipeline_mode<synchronous>, transform_indices = @transform_1, window_bounds = array<i64: 48, 128>}, {pipeline_mode = #tpu.pipeline_mode<synchronous>, transform_indices = @transform_2, window_bounds = array<i64: 128, 128>}, {pipeline_mode = #tpu.pipeline_mode<synchronous>, transform_indices = @transform_3, window_bounds = array<i64: 128, 128>}, {pipeline_mode = #tpu.pipeline_mode<synchronous>, transform_indices = @transform_4, window_bounds = array<i64: 1, 128>}, {pipeline_mode = #tpu.pipeline_mode<synchronous>, transform_indices = @transform_5, window_bounds = array<i64: 1, 128>}, {pipeline_mode = #tpu.pipeline_mode<synchronous>, transform_indices = @transform_6, window_bounds = array<i64: 1, 128>}, {transform_indices = @transform_7, window_bounds = array<i64: 8, 128>}]} {
    %c0 = arith.constant 0 : index
    %c0_0 = arith.constant 0 : index
    %0 = vector.load %arg1[%c0, %c0_0] : memref<8x48xf32, #tpu.memory_space<vmem>>, vector<8x48xf32>
    %1 = arith.truncf %0 : vector<8x48xf32> to vector<8x48xbf16>
    %c0_1 = arith.constant 0 : index
    %c0_2 = arith.constant 0 : index
    %2 = vector.load %arg2[%c0_1, %c0_2] : memref<48x128xbf16, #tpu.memory_space<vmem>>, vector<48x128xbf16>
    %cst = arith.constant dense<0.000000e+00> : vector<8x128xf32>
    %3 = tpu.matmul %1, %2, %cst {dimension_numbers = #tpu.dot_dimension_numbers<[1], [0], [0], [1], [0, 0, 1, 1], [], []>} : vector<8x48xbf16>, vector<48x128xbf16>, vector<8x128xf32> -> vector<8x128xf32>
    %c0_3 = arith.constant 0 : index
    %c0_4 = arith.constant 0 : index
    %4 = vector.load %arg5[%c0_3, %c0_4] : memref<1x128xf32, #tpu.memory_space<vmem>>, vector<1x128xf32>
    %5 = vector.broadcast %4 : vector<1x128xf32> to vector<8x128xf32>
    %6 = arith.addf %3, %5 : vector<8x128xf32>
    %cst_5 = arith.constant 0.000000e+00 : f32
    %7 = vector.broadcast %cst_5 : f32 to vector<8x128xf32>
    %8 = arith.maximumf %6, %7 : vector<8x128xf32>
    %9 = arith.truncf %8 : vector<8x128xf32> to vector<8x128xbf16>
    %c0_6 = arith.constant 0 : index
    %c0_7 = arith.constant 0 : index
    %10 = vector.load %arg3[%c0_6, %c0_7] : memref<128x128xbf16, #tpu.memory_space<vmem>>, vector<128x128xbf16>
    %cst_8 = arith.constant dense<0.000000e+00> : vector<8x128xf32>
    %11 = tpu.matmul %9, %10, %cst_8 {dimension_numbers = #tpu.dot_dimension_numbers<[1], [0], [0], [1], [0, 0, 1, 1], [], []>} : vector<8x128xbf16>, vector<128x128xbf16>, vector<8x128xf32> -> vector<8x128xf32>
    %c0_9 = arith.constant 0 : index
    %c0_10 = arith.constant 0 : index
    %12 = vector.load %arg6[%c0_9, %c0_10] : memref<1x128xf32, #tpu.memory_space<vmem>>, vector<1x128xf32>
    %13 = vector.broadcast %12 : vector<1x128xf32> to vector<8x128xf32>
    %14 = arith.addf %11, %13 : vector<8x128xf32>
    %cst_11 = arith.constant 0.000000e+00 : f32
    %15 = vector.broadcast %cst_11 : f32 to vector<8x128xf32>
    %16 = arith.maximumf %14, %15 : vector<8x128xf32>
    %17 = arith.truncf %16 : vector<8x128xf32> to vector<8x128xbf16>
    %c0_12 = arith.constant 0 : index
    %c0_13 = arith.constant 0 : index
    %18 = vector.load %arg4[%c0_12, %c0_13] : memref<128x128xbf16, #tpu.memory_space<vmem>>, vector<128x128xbf16>
    %cst_14 = arith.constant dense<0.000000e+00> : vector<8x128xf32>
    %19 = tpu.matmul %17, %18, %cst_14 {dimension_numbers = #tpu.dot_dimension_numbers<[1], [0], [0], [1], [0, 0, 1, 1], [], []>} : vector<8x128xbf16>, vector<128x128xbf16>, vector<8x128xf32> -> vector<8x128xf32>
    %c0_15 = arith.constant 0 : index
    %c0_16 = arith.constant 0 : index
    %20 = vector.load %arg7[%c0_15, %c0_16] : memref<1x128xf32, #tpu.memory_space<vmem>>, vector<1x128xf32>
    %21 = vector.broadcast %20 : vector<1x128xf32> to vector<8x128xf32>
    %22 = arith.addf %19, %21 : vector<8x128xf32>
    %c0_17 = arith.constant 0 : index
    %c0_18 = arith.constant 0 : index
    %23 = vector.load %arg8[%c0_17, %c0_18] : memref<8x128xf32, #tpu.memory_space<vmem>>, vector<8x128xf32>
    tpu.vector_store %arg8[%c0_17, %c0_18], %22 {strides = array<i32>} : memref<8x128xf32, #tpu.memory_space<vmem>>, vector<8x128xf32>,
    return
  }
  func.func @transform_0(%arg0: i32) -> (i32, i32) {
    %c0_i32 = arith.constant 0 : i32
    %c0_i32_0 = arith.constant 0 : i32
    return %arg0, %c0_i32 : i32, i32
  }
  func.func @transform_1(%arg0: i32) -> (i32, i32) {
    %c0_i32 = arith.constant 0 : i32
    %c0_i32_0 = arith.constant 0 : i32
    %c0_i32_1 = arith.constant 0 : i32
    return %c0_i32, %c0_i32_0 : i32, i32
  }
  func.func @transform_2(%arg0: i32) -> (i32, i32) {
    %c0_i32 = arith.constant 0 : i32
    %c0_i32_0 = arith.constant 0 : i32
    %c0_i32_1 = arith.constant 0 : i32
    return %c0_i32, %c0_i32_0 : i32, i32
  }
  func.func @transform_3(%arg0: i32) -> (i32, i32) {
    %c0_i32 = arith.constant 0 : i32
    %c0_i32_0 = arith.constant 0 : i32
    %c0_i32_1 = arith.constant 0 : i32
    return %c0_i32, %c0_i32_0 : i32, i32
  }
  func.func @transform_4(%arg0: i32) -> (i32, i32) {
    %c0_i32 = arith.constant 0 : i32
    %c0_i32_0 = arith.constant 0 : i32
    %c0_i32_1 = arith.constant 0 : i32
    return %c0_i32, %c0_i32_0 : i32, i32
  }
  func.func @transform_5(%arg0: i32) -> (i32, i32) {
    %c0_i32 = arith.constant 0 : i32
    %c0_i32_0 = arith.constant 0 : i32
    %c0_i32_1 = arith.constant 0 : i32
    return %c0_i32, %c0_i32_0 : i32, i32
  }
  func.func @transform_6(%arg0: i32) -> (i32, i32) {
    %c0_i32 = arith.constant 0 : i32
    %c0_i32_0 = arith.constant 0 : i32
    %c0_i32_1 = arith.constant 0 : i32
    return %c0_i32, %c0_i32_0 : i32, i32
  }
  func.func @transform_7(%arg0: i32) -> (i32, i32) {
    %c0_i32 = arith.constant 0 : i32
    %c0_i32_0 = arith.constant 0 : i32
    return %arg0, %c0_i32 : i32, i32
  }
}

</mosaic_0001>

<llo_original>
// kernel: _lambda_.1
$region0: #{_lambda_.1}
  #allocation0 [shape = 'u32[]', space=smem, size = 0x4, offset = 0x4, fixed_abs, tag = 'smem constant byte address 0x4 - core index']
  #allocation1 [shape = 'u32[144,128]{1,0:T(1,128)}', space=vmem, size = 0x12000, scoped, tag = 'internal scratch']
  %s0 = inlined_call_operand.hbm [shape: f32[2,48], index: 0, kind: input, shape index: {}]
  %s1 = inlined_call_operand.hbm [shape: bf16[48,128], index: 1, kind: input, shape index: {}]
  %s2 = inlined_call_operand.hbm [shape: bf16[128,128], index: 2, kind: input, shape index: {}]
  %s3 = inlined_call_operand.hbm [shape: bf16[128,128], index: 3, kind: input, shape index: {}]
  %s4 = inlined_call_operand.vmem [shape: f32[1,128], index: 4, kind: input, shape index: {}]
  %s5 = inlined_call_operand.vmem [shape: f32[1,128], index: 5, kind: input, shape index: {}]
  %s6 = inlined_call_operand.vmem [shape: f32[1,128], index: 6, kind: input, shape index: {}]
  %s7 = inlined_call_operand.hbm [shape: f32[2,128], index: 7, kind: output, shape index: {}]
  %s8 = sld [smem:[#allocation0]]
  $region54: #{_lambda_.1} parent=0
    _
  %s10 = ssub.s32 1, %s8
  %s11 = scalar_select 0, %s10, %s8
  $region1: #{_lambda_.1} parent=0
    #allocation2 [shape = 'u8[4096]{0}', space=vmem, size = 0x1000, scoped, tag = 'input window, operand 0, single buffered']
    #allocation3 [shape = 's32[1]{0}', space=sflag, size = 0x4, scoped, tag = 'scoped memory for _lambda_.1']
    #allocation4 [shape = 's32[1]{0}', space=sflag, size = 0x4, scoped, tag = 'scoped memory for _lambda_.1']
    #allocation5 [shape = 'u8[12288]{0}', space=vmem, size = 0x3000, scoped, tag = 'input window, operand 1, single buffered']
    #allocation6 [shape = 's32[1]{0}', space=sflag, size = 0x4, scoped, tag = 'scoped memory for _lambda_.1']
    #allocation7 [shape = 'u8[32768]{0}', space=vmem, size = 0x8000, scoped, tag = 'input window, operand 2, single buffered']
    #allocation8 [shape = 'u8[32768]{0}', space=vmem, size = 0x8000, scoped, tag = 'input window, operand 3, single buffered']
    #allocation9 [shape = 's32[1]{0}', space=sflag, size = 0x4, scoped, tag = 'scoped memory for _lambda_.1']
    #allocation10 [shape = 'u8[4096]{0}', space=vmem, size = 0x1000, scoped, tag = 'output window, operand 0, single buffered']
    %12 = vsyncpa [#allocation3], 0
    %13 = vsyncpa [#allocation6], 0
    %14 = vsyncpa [#allocation9], 0
    %15 = vsyncpa [#allocation4], 0
    // Predicated region
    $region2: #{_lambda_.1} parent=1 // pred_check
      _
    $region3: #{_lambda_.1} parent=1 // pred_check_branch
      %17 = sbr.rel (0) target = $region5
    $region4: #{_lambda_.1} parent=1 // pred_region
      %s19 = ssub.s32 128, 32
      %20 = vsyncadd [#allocation3], %s19
      %s21 = sshll.u32 [#allocation2], 4
      %s22 = int_to_ptr.vmem [resolvable:$true] %s21
      %27 = dma.hbm_to_vmem [thread:$0]  %s0, 32, %s22, [#allocation3], 32, 32, 2
    $region5: #{_lambda_.1} parent=1 // pred_fallthru
      _
    // Predicated region
    $region6: #{_lambda_.1} parent=1 // pred_check
      _
    $region7: #{_lambda_.1} parent=1 // pred_check_branch
      %29 = sbr.rel (0) target = $region9
    $region8: #{_lambda_.1} parent=1 // pred_region
      %s31 = ssub.s32 384, 384
      %32 = vsyncadd [#allocation6], %s31
      %s33 = sshll.u32 [#allocation5], 4
      %s34 = int_to_ptr.vmem [resolvable:$true] %s33
      %39 = dma.hbm_to_vmem [thread:$0]  %s1, 384, %s34, [#allocation6], 64, 64, 4
    $region9: #{_lambda_.1} parent=1 // pred_fallthru
      _
    // Predicated region
    $region10: #{_lambda_.1} parent=1 // pred_check
      _
    $region11: #{_lambda_.1} parent=1 // pred_check_branch
      %41 = sbr.rel (0) target = $region13
    $region12: #{_lambda_.1} parent=1 // pred_region
      %s43 = ssub.s32 1024, 1024
      %44 = vsyncadd [#allocation6], %s43
      %s45 = sshll.u32 [#allocation7], 4
      %s46 = int_to_ptr.vmem [resolvable:$true] %s45
      %51 = dma.hbm_to_vmem [thread:$0]  %s2, 1024, %s46, [#allocation6], 64, 64, 4
    $region13: #{_lambda_.1} parent=1 // pred_fallthru
      _
    // Predicated region
    $region14: #{_lambda_.1} parent=1 // pred_check
      _
    $region15: #{_lambda_.1} parent=1 // pred_check_branch
      %53 = sbr.rel (0) target = $region17
    $region16: #{_lambda_.1} parent=1 // pred_region
      %s55 = ssub.s32 1024, 1024
      %56 = vsyncadd [#allocation9], %s55
      %s57 = sshll.u32 [#allocation8], 4
      %s58 = int_to_ptr.vmem [resolvable:$true] %s57
      %63 = dma.hbm_to_vmem [thread:$0]  %s3, 1024, %s58, [#allocation9], 64, 64, 4
    $region17: #{_lambda_.1} parent=1 // pred_fallthru
      _
    // Predicated region
    $region18: #{_lambda_.1} parent=1 // pred_check
      _
    $region19: #{_lambda_.1} parent=1 // pred_check_branch
      %65 = sbr.rel (0) target = $region21
    $region20: #{_lambda_.1} parent=1 // pred_region
      _
    $region21: #{_lambda_.1} parent=1 // pred_fallthru
      _
    // Predicated region
    $region22: #{_lambda_.1} parent=1 // pred_check
      _
    $region23: #{_lambda_.1} parent=1 // pred_check_branch
      %67 = sbr.rel (0) target = $region25
    $region24: #{_lambda_.1} parent=1 // pred_region
      _
    $region25: #{_lambda_.1} parent=1 // pred_fallthru
      _
    // Predicated region
    $region26: #{_lambda_.1} parent=1 // pred_check
      _
    $region27: #{_lambda_.1} parent=1 // pred_check_branch
      %69 = sbr.rel (0) target = $region29
    $region28: #{_lambda_.1} parent=1 // pred_region
      _
    $region29: #{_lambda_.1} parent=1 // pred_fallthru
      _
    // Predicated region
    $region30: #{_lambda_.1} parent=1 // pred_check
      _
    $region31: #{_lambda_.1} parent=1 // pred_check_branch
      %71 = sbr.rel (0) target = $region33
    $region32: #{_lambda_.1} parent=1 // pred_region
      %72 = dma.done [#allocation3], 128
    $region33: #{_lambda_.1} parent=1 // pred_fallthru
      _
    // Predicated region
    $region34: #{_lambda_.1} parent=1 // pred_check
      _
    $region35: #{_lambda_.1} parent=1 // pred_check_branch
      %74 = sbr.rel (0) target = $region37
    $region36: #{_lambda_.1} parent=1 // pred_region
      %75 = dma.done [#allocation6], 384
    $region37: #{_lambda_.1} parent=1 // pred_fallthru
      _
    // Predicated region
    $region38: #{_lambda_.1} parent=1 // pred_check
      _
    $region39: #{_lambda_.1} parent=1 // pred_check_branch
      %77 = sbr.rel (0) target = $region41
    $region40: #{_lambda_.1} parent=1 // pred_region
      %78 = dma.done [#allocation6], 1024
    $region41: #{_lambda_.1} parent=1 // pred_fallthru
      _
    // Predicated region
    $region42: #{_lambda_.1} parent=1 // pred_check
      _
    $region43: #{_lambda_.1} parent=1 // pred_check_branch
      %80 = sbr.rel (0) target = $region45
    $region44: #{_lambda_.1} parent=1 // pred_region
      %81 = dma.done [#allocation9], 1024
    $region45: #{_lambda_.1} parent=1 // pred_fallthru
      _
    %v83 = vld [vmem:[#allocation2] sm:$0xff]
    %v84 = vpack.c.bf16 %v83, %v83
    %v85 = vld [vmem:[#allocation5] sm:$0xf]
    %v86 = vld [vmem:[#allocation5 + $0x4] sm:$0xf]
    %v87 = vld [vmem:[#allocation5 + $0x8] sm:$0xf]
    %v88 = vld [vmem:[#allocation5 + $0xc] sm:$0xf]
    %v89 = vld [vmem:[#allocation5 + $0x10] sm:$0xf]
    %v90 = vld [vmem:[#allocation5 + $0x14] sm:$0xf]
    %v91 = vld [vmem:[%s4] sm:$0x1]
    %v93 = vlaneseq
    %v94 = vshrl.u32 %v93, 7
    %v95 = vsub.s32 0, %v94
    %v96 = vrot.slane %v91, %v95
    %v104 = vunpack.c.l.b16 %v85
    %v105 = vunpack.c.l.b16 %v86
    %v106 = vunpack.c.l.b16 %v87
    %v107 = vunpack.c.l.b16 %v88
    %v108 = vunpack.c.l.b16 %v89
    %v109 = vunpack.c.l.b16 %v90
    %v110 = vpack.c.b16 %v105, %v104
    %v111 = vpack.c.b16 %v107, %v106
    %v112 = vpack.c.b16 %v109, %v108
    %vm116 = vcmask 392192
    %v118 = vsel %vm116, %v84, 0
    %120 = vmatprep.subr.bf16.mxu0 0
    %121 = vmatpush1.bf16.msra.mxu0 0
    %122 = vmatprep.subr.bf16.mxu0 0
    %123 = vmatpush1.bf16.msra.mxu0 0
    %124 = vmatprep.subr.bf16.mxu0 0
    %125 = vmatpush1.bf16.msra.mxu0 0
    %126 = vmatprep.subr.bf16.mxu0 0
    %127 = vmatpush1.bf16.msra.mxu0 0
    %128 = vmatprep.subr.bf16.mxu0 0
    %129 = vmatpush1.bf16.msra.mxu0 0
    %130 = vmatprep.subr.bf16.mxu0 0
    %131 = vmatpush1.bf16.msra.mxu0 %v112
    %132 = vmatprep.subr.bf16.mxu0 0
    %133 = vmatpush1.bf16.msra.mxu0 %v111
    %134 = vmatprep.subr.bf16.mxu0 0
    %135 = vmatpush1.bf16.msra.mxu0 %v110
    %136 = vmatprep.subr.bf16.mxu0 0
    %137 = vmatpush2.bf16.msra.mxu0 0
    %138 = vmatprep.subr.bf16.mxu0 0
    %139 = vmatpush2.bf16.msra.mxu0 0
    %140 = vmatprep.subr.bf16.mxu0 0
    %141 = vmatpush2.bf16.msra.mxu0 0
    %142 = vmatprep.subr.bf16.mxu0 0
    %143 = vmatpush2.bf16.msra.mxu0 0
    %144 = vmatprep.subr.bf16.mxu0 0
    %145 = vmatpush2.bf16.msra.mxu0 0
    %146 = vmatprep.subr.bf16.mxu0 0
    %147 = vmatpush2.bf16.msra.mxu0 0
    %148 = vmatprep.subr.bf16.mxu0 0
    %149 = vmatpush2.bf16.msra.mxu0 0
    %150 = vmatprep.subr.bf16.mxu0 0
    %151 = vmatpush2.bf16.msra.mxu0 0
    %152 = vmatprep.mubr.bf16.mxu0 0
    %153 = vmatmul.mubr.bf16.gmra.mxu0 %v118
    %v154 = vpop.f32.mrf.mxu0
    %v155 = vadd.f32 %v96, %v154
    %v156 = vpop.f32.mrf.mxu0
    %v157 = vpop.f32.mrf.mxu0
    %v158 = vpop.f32.mrf.mxu0
    %159 = vdwg.mxu0
    %v160 = vmax.f32 %v155, 0.0
    %v161 = vpack.c.bf16 %v160, %v160
    %v162 = vld [vmem:[#allocation7] sm:$0xf]
    %v163 = vld [vmem:[#allocation7 + $0x4] sm:$0xf]
    %v164 = vld [vmem:[#allocation7 + $0x8] sm:$0xf]
    %v165 = vld [vmem:[#allocation7 + $0xc] sm:$0xf]
    %v166 = vld [vmem:[#allocation7 + $0x10] sm:$0xf]
    %v167 = vld [vmem:[#allocation7 + $0x14] sm:$0xf]
    %v168 = vld [vmem:[#allocation7 + $0x18] sm:$0xf]
    %v169 = vld [vmem:[#allocation7 + $0x1c] sm:$0xf]
    %v170 = vld [vmem:[#allocation7 + $0x20] sm:$0xf]
    %v171 = vld [vmem:[#allocation7 + $0x24] sm:$0xf]
    %v172 = vld [vmem:[#allocation7 + $0x28] sm:$0xf]
    %v173 = vld [vmem:[#allocation7 + $0x2c] sm:$0xf]
    %v174 = vld [vmem:[#allocation7 + $0x30] sm:$0xf]
    %v175 = vld [vmem:[#allocation7 + $0x34] sm:$0xf]
    %v176 = vld [vmem:[#allocation7 + $0x38] sm:$0xf]
    %v177 = vld [vmem:[#allocation7 + $0x3c] sm:$0xf]
    %v178 = vld [vmem:[%s5] sm:$0x1]
    %v180 = vlaneseq
    %v181 = vshrl.u32 %v180, 7
    %v182 = vsub.s32 0, %v181
    %v183 = vrot.slane %v178, %v182
    %v201 = vunpack.c.l.b16 %v162
    %v202 = vunpack.c.l.b16 %v163
    %v203 = vunpack.c.l.b16 %v164
    %v204 = vunpack.c.l.b16 %v165
    %v205 = vunpack.c.l.b16 %v166
    %v206 = vunpack.c.l.b16 %v167
    %v207 = vunpack.c.l.b16 %v168
    %v208 = vunpack.c.l.b16 %v169
    %v209 = vunpack.c.l.b16 %v170
    %v210 = vunpack.c.l.b16 %v171
    %v211 = vunpack.c.l.b16 %v172
    %v212 = vunpack.c.l.b16 %v173
    %v213 = vunpack.c.l.b16 %v174
    %v214 = vunpack.c.l.b16 %v175
    %v215 = vunpack.c.l.b16 %v176
    %v216 = vunpack.c.l.b16 %v177
    %v217 = vpack.c.b16 %v202, %v201
    %v218 = vpack.c.b16 %v204, %v203
    %v219 = vpack.c.b16 %v206, %v205
    %v220 = vpack.c.b16 %v208, %v207
    %v221 = vpack.c.b16 %v210, %v209
    %v222 = vpack.c.b16 %v212, %v211
    %v223 = vpack.c.b16 %v214, %v213
    %v224 = vpack.c.b16 %v216, %v215
    %233 = vmatprep.subr.bf16.mxu0 0
    %234 = vmatpush1.bf16.msra.mxu0 %v224
    %235 = vmatprep.subr.bf16.mxu0 0
    %236 = vmatpush1.bf16.msra.mxu0 %v223
    %237 = vmatprep.subr.bf16.mxu0 0
    %238 = vmatpush1.bf16.msra.mxu0 %v222
    %239 = vmatprep.subr.bf16.mxu0 0
    %240 = vmatpush1.bf16.msra.mxu0 %v221
    %241 = vmatprep.subr.bf16.mxu0 0
    %242 = vmatpush1.bf16.msra.mxu0 %v220
    %243 = vmatprep.subr.bf16.mxu0 0
    %244 = vmatpush1.bf16.msra.mxu0 %v219
    %245 = vmatprep.subr.bf16.mxu0 0
    %246 = vmatpush1.bf16.msra.mxu0 %v218
    %247 = vmatprep.subr.bf16.mxu0 0
    %248 = vmatpush1.bf16.msra.mxu0 %v217
    %249 = vmatprep.subr.bf16.mxu0 0
    %250 = vmatpush2.bf16.msra.mxu0 0
    %251 = vmatprep.subr.bf16.mxu0 0
    %252 = vmatpush2.bf16.msra.mxu0 0
    %253 = vmatprep.subr.bf16.mxu0 0
    %254 = vmatpush2.bf16.msra.mxu0 0
    %255 = vmatprep.subr.bf16.mxu0 0
    %256 = vmatpush2.bf16.msra.mxu0 0
    %257 = vmatprep.subr.bf16.mxu0 0
    %258 = vmatpush2.bf16.msra.mxu0 0
    %259 = vmatprep.subr.bf16.mxu0 0
    %260 = vmatpush2.bf16.msra.mxu0 0
    %261 = vmatprep.subr.bf16.mxu0 0
    %262 = vmatpush2.bf16.msra.mxu0 0
    %263 = vmatprep.subr.bf16.mxu0 0
    %264 = vmatpush2.bf16.msra.mxu0 0
    %265 = vmatprep.mubr.bf16.mxu0 0
    %266 = vmatmul.mubr.bf16.gmra.mxu0 %v161
    %v267 = vpop.f32.mrf.mxu0
    %v268 = vadd.f32 %v183, %v267
    %v269 = vpop.f32.mrf.mxu0
    %v270 = vpop.f32.mrf.mxu0
    %v271 = vpop.f32.mrf.mxu0
    %272 = vdwg.mxu0
    %v273 = vmax.f32 %v268, 0.0
    %v274 = vpack.c.bf16 %v273, %v273
    %v275 = vld [vmem:[#allocation8] sm:$0xf]
    %v276 = vld [vmem:[#allocation8 + $0x4] sm:$0xf]
    %v277 = vld [vmem:[#allocation8 + $0x8] sm:$0xf]
    %v278 = vld [vmem:[#allocation8 + $0xc] sm:$0xf]
    %v279 = vld [vmem:[#allocation8 + $0x10] sm:$0xf]
    %v280 = vld [vmem:[#allocation8 + $0x14] sm:$0xf]
    %v281 = vld [vmem:[#allocation8 + $0x18] sm:$0xf]
    %v282 = vld [vmem:[#allocation8 + $0x1c] sm:$0xf]
    %v283 = vld [vmem:[#allocation8 + $0x20] sm:$0xf]
    %v284 = vld [vmem:[#allocation8 + $0x24] sm:$0xf]
    %v285 = vld [vmem:[#allocation8 + $0x28] sm:$0xf]
    %v286 = vld [vmem:[#allocation8 + $0x2c] sm:$0xf]
    %v287 = vld [vmem:[#allocation8 + $0x30] sm:$0xf]
    %v288 = vld [vmem:[#allocation8 + $0x34] sm:$0xf]
    %v289 = vld [vmem:[#allocation8 + $0x38] sm:$0xf]
    %v290 = vld [vmem:[#allocation8 + $0x3c] sm:$0xf]
    %v291 = vld [vmem:[%s6] sm:$0x1]
    %v293 = vlaneseq
    %v294 = vshrl.u32 %v293, 7
    %v295 = vsub.s32 0, %v294
    %v296 = vrot.slane %v291, %v295
    %v314 = vunpack.c.l.b16 %v275
    %v315 = vunpack.c.l.b16 %v276
    %v316 = vunpack.c.l.b16 %v277
    %v317 = vunpack.c.l.b16 %v278
    %v318 = vunpack.c.l.b16 %v279
    %v319 = vunpack.c.l.b16 %v280
    %v320 = vunpack.c.l.b16 %v281
    %v321 = vunpack.c.l.b16 %v282
    %v322 = vunpack.c.l.b16 %v283
    %v323 = vunpack.c.l.b16 %v284
    %v324 = vunpack.c.l.b16 %v285
    %v325 = vunpack.c.l.b16 %v286
    %v326 = vunpack.c.l.b16 %v287
    %v327 = vunpack.c.l.b16 %v288
    %v328 = vunpack.c.l.b16 %v289
    %v329 = vunpack.c.l.b16 %v290
    %v330 = vpack.c.b16 %v315, %v314
    %v331 = vpack.c.b16 %v317, %v316
    %v332 = vpack.c.b16 %v319, %v318
    %v333 = vpack.c.b16 %v321, %v320
    %v334 = vpack.c.b16 %v323, %v322
    %v335 = vpack.c.b16 %v325, %v324
    %v336 = vpack.c.b16 %v327, %v326
    %v337 = vpack.c.b16 %v329, %v328
    %346 = vmatprep.subr.bf16.mxu0 0
    %347 = vmatpush1.bf16.msra.mxu0 %v337
    %348 = vmatprep.subr.bf16.mxu0 0
    %349 = vmatpush1.bf16.msra.mxu0 %v336
    %350 = vmatprep.subr.bf16.mxu0 0
    %351 = vmatpush1.bf16.msra.mxu0 %v335
    %352 = vmatprep.subr.bf16.mxu0 0
    %353 = vmatpush1.bf16.msra.mxu0 %v334
    %354 = vmatprep.subr.bf16.mxu0 0
    %355 = vmatpush1.bf16.msra.mxu0 %v333
    %356 = vmatprep.subr.bf16.mxu0 0
    %357 = vmatpush1.bf16.msra.mxu0 %v332
    %358 = vmatprep.subr.bf16.mxu0 0
    %359 = vmatpush1.bf16.msra.mxu0 %v331
    %360 = vmatprep.subr.bf16.mxu0 0
    %361 = vmatpush1.bf16.msra.mxu0 %v330
    %362 = vmatprep.subr.bf16.mxu0 0
    %363 = vmatpush2.bf16.msra.mxu0 0
    %364 = vmatprep.subr.bf16.mxu0 0
    %365 = vmatpush2.bf16.msra.mxu0 0
    %366 = vmatprep.subr.bf16.mxu0 0
    %367 = vmatpush2.bf16.msra.mxu0 0
    %368 = vmatprep.subr.bf16.mxu0 0
    %369 = vmatpush2.bf16.msra.mxu0 0
    %370 = vmatprep.subr.bf16.mxu0 0
    %371 = vmatpush2.bf16.msra.mxu0 0
    %372 = vmatprep.subr.bf16.mxu0 0
    %373 = vmatpush2.bf16.msra.mxu0 0
    %374 = vmatprep.subr.bf16.mxu0 0
    %375 = vmatpush2.bf16.msra.mxu0 0
    %376 = vmatprep.subr.bf16.mxu0 0
    %377 = vmatpush2.bf16.msra.mxu0 0
    %378 = vmatprep.mubr.bf16.mxu0 0
    %379 = vmatmul.mubr.bf16.gmra.mxu0 %v274
    %v380 = vpop.f32.mrf.mxu0
    %v381 = vadd.f32 %v296, %v380
    %v382 = vpop.f32.mrf.mxu0
    %v383 = vpop.f32.mrf.mxu0
    %v384 = vpop.f32.mrf.mxu0
    %385 = vdwg.mxu0
    %386 = vst [vmem:[#allocation10] sm:$0xff] %v381
    // Predicated region
    $region46: #{_lambda_.1} parent=1 // pred_check
      _
    $region47: #{_lambda_.1} parent=1 // pred_check_branch
      %388 = sbr.rel (0) target = $region49
    $region48: #{_lambda_.1} parent=1 // pred_region
      %s390 = ssub.s32 128, 32
      %391 = vsyncadd [#allocation4], %s390
      %s392 = sshll.u32 [#allocation10], 4
      %s393 = int_to_ptr.vmem [resolvable:$true] %s392
      %398 = dma.vmem_to_hbm [thread:$0]  %s393, 32, %s7, [#allocation4], 32, 32, 2
    $region49: #{_lambda_.1} parent=1 // pred_fallthru
      _
    // Predicated region
    $region50: #{_lambda_.1} parent=1 // pred_check
      _
    $region51: #{_lambda_.1} parent=1 // pred_check_branch
      %400 = sbr.rel (0) target = $region53
    $region52: #{_lambda_.1} parent=1 // pred_region
      %401 = dma.done [#allocation4], 128
    $region53: #{_lambda_.1} parent=1 // pred_fallthru
      _
    %402 = vsyncpa [#allocation3], 1
    %403 = vsyncpa [#allocation6], 1
    %404 = vsyncpa [#allocation9], 1
    %405 = vsyncpa [#allocation4], 1

</llo_original>
